<compile_context>
chip_gen: v5e
topology: v5e:2x2
jax: 0.10.0
libtpu: 0.0.40
codegen_flags: <defaults>
</compile_context>

<pallas_src>
import functools

import jax
import jax.numpy as jnp
from jax.experimental import pallas as pl
from jax.experimental.pallas import tpu as pltpu


def _round_up(x, n):
    return ((x + n - 1) // n) * n


def _chip_info():
    """Returns (vmem_bytes, lane_multiple, multi_tc) with safe fallbacks."""
    kind = ""
    try:
        kind = jax.devices()[0].device_kind.lower()
    except Exception:
        pass
    vmem = None
    try:
        vmem = int(getattr(pltpu.get_tpu_info(), "vmem_capacity_bytes", 0)) or None
    except Exception:
        pass
    is_v5e = ("v5 lite" in kind) or ("v5e" in kind) or ("v5lite" in kind)
    is_v7 = "7" in kind
    multi_tc = is_v7 or ("v4" in kind) or ("v5p" in kind)
    if vmem is None:
        vmem = (64 << 20) if is_v7 else (128 << 20)
    if is_v7:
        vmem = min(vmem, 64 << 20)          # per-TC VMEM on v7x
    lane = 128 if is_v5e else 256           # MXU width: 128 on v5e, 256 on v6e/v7x
    return int(vmem), int(lane), bool(multi_tc)


def _glu_kernel(x_ref, w12_ref, w3_ref, o_ref, acc_ref):
    """One (token-tile i, dim_inner-tile j) step of (sigmoid(x@w1)*(x@w2))@w3.

    x_ref   : (tm, dim_p)      bf16
    w12_ref : (dim_p, 2*tn)    bf16   block j = [w1_tile_j | w2_tile_j]
    w3_ref  : (tn, dim_p)      bf16
    o_ref   : (tm, dim_p)      x.dtype
    acc_ref : (tm, dim_p)      f32 scratch accumulator
    """
    j = pl.program_id(1)
    tn = w3_ref.shape[0]

    @pl.when(j == 0)
    def _init():
        acc_ref[...] = jnp.zeros_like(acc_ref)

    # One wide MXU matmul covers both branches of this dim_inner tile.
    h12 = jnp.dot(x_ref[...], w12_ref[...], preferred_element_type=jnp.float32)
    # Static, lane-aligned slices (tn is a multiple of 128/256).
    gated = jax.nn.sigmoid(h12[:, :tn]) * h12[:, tn:]
    acc_ref[...] += jnp.dot(gated.astype(jnp.bfloat16), w3_ref[...],
                            preferred_element_type=jnp.float32)

    @pl.when(j == pl.num_programs(1) - 1)
    def _finish():
        o_ref[...] = acc_ref[...].astype(o_ref.dtype)


def glu_config(dim, dim_inner):
    """Chip- and shape-dependent tiling configuration (computed once)."""
    vmem, lane, multi_tc = _chip_info()
    budget = int(0.85 * vmem)               # leave headroom below physical VMEM
    dim_p = _round_up(dim, lane)

    # Reduction tile over dim_inner: as wide as possible up to 512, but keep
    # the (double-buffered) weight blocks under ~45% of the VMEM budget.
    tn = min(512, _round_up(dim_inner, lane))
    tn = _round_up(tn, lane)

    def _weight_block_bytes(t):             # 2 bufs each, bf16
        return 2 * (dim_p * 2 * t + t * dim_p) * 2

    while tn > lane and _weight_block_bytes(tn) > 0.45 * budget:
        tn -= lane
    dim_inner_p = _round_up(dim_inner, tn)

    return dict(dim=dim, dim_inner=dim_inner, dim_p=dim_p, dim_inner_p=dim_inner_p,
                tn=tn, lane=lane, budget=budget, multi_tc=multi_tc)


def prepare_glu_weights(w1, w2, w3, cfg):
    """Pad / fuse / cast weights once (hoisted out of the per-call path)."""
    dim, dim_inner = w1.shape
    dim_p, dim_inner_p, tn = cfg["dim_p"], cfg["dim_inner_p"], cfg["tn"]
    nj = dim_inner_p // tn
    w1p = jnp.pad(w1, ((0, dim_p - dim), (0, dim_inner_p - dim_inner)))
    w2p = jnp.pad(w2, ((0, dim_p - dim), (0, dim_inner_p - dim_inner)))
    # Interleave per reduction tile so fused block j is [w1_tile_j | w2_tile_j].
    w12 = jnp.concatenate(
        [w1p.reshape(dim_p, nj, tn), w2p.reshape(dim_p, nj, tn)], axis=2
    ).reshape(dim_p, 2 * dim_inner_p).astype(jnp.bfloat16)
    w3p = jnp.pad(w3, ((0, dim_inner_p - dim_inner), (0, dim_p - dim))
                  ).astype(jnp.bfloat16)
    return w12, w3p


def _choose_tm(m_p8, cfg, out_itemsize):
    """Token-tile size (multiple of 8) and block count under the VMEM budget."""
    dim_p, tn = cfg["dim_p"], cfg["tn"]
    budget, multi_tc = cfg["budget"], cfg["multi_tc"]
    headroom = 8 << 20                       # Mosaic internal scratch + spill slack
    w_bytes = 2 * (dim_p * 2 * tn + tn * dim_p) * 2
    avail = max(budget - w_bytes - headroom, 2 << 20)
    # Per token row: x (2 bufs bf16) + out (2 bufs) + f32 acc + h12/gated temps.
    per_row = (2 * dim_p * 2 + 2 * dim_p * out_itemsize + dim_p * 4
               + 2 * tn * 4 + tn * 4 + tn * 2 + tn * 4)
    tm = max(8, min(2048, (avail // per_row) // 8 * 8))
    tm = min(tm, m_p8)

    nblocks = pl.cdiv(m_p8, tm)
    # On megacore chips keep an even block count so both TCs stay busy.
    if multi_tc and m_p8 > 8 and nblocks % 2 == 1:
        nblocks += 1
    tm = _round_up(pl.cdiv(m_p8, nblocks), 8)
    return int(tm), int(nblocks)


@functools.partial(
    jax.jit,
    static_argnames=("dim_p", "dim_inner_p", "tn", "tm", "nblocks", "vmem_limit"))
def _glu_call(x2d, w12, w3p, *, dim_p, dim_inner_p, tn, tm, nblocks, vmem_limit):
    m, dim = x2d.shape
    m_p = tm * nblocks
    nj = dim_inner_p // tn
    out_dtype = x2d.dtype

    # Zero padding is exact (see header); bf16 MXU operands.
    x_pad = jnp.pad(x2d, ((0, m_p - m), (0, dim_p - dim))).astype(jnp.bfloat16)

    flops = 2 * m_p * dim_p * (2 * dim_inner_p) + 2 * m_p * dim_inner_p * dim_p
    bytes_accessed = (m_p * dim_p * 2
                      + nblocks * dim_p * 2 * dim_inner_p * 2   # w12 re-streamed per i
                      + nblocks * dim_inner_p * dim_p * 2       # w3 re-streamed per i
                      + m_p * dim_p * out_dtype.itemsize)
    cost = pl.CostEstimate(flops=int(flops),
                           transcendentals=int(m_p * dim_inner_p),
                           bytes_accessed=int(bytes_accessed))

    out2d = pl.pallas_call(
        _glu_kernel,
        out_shape=jax.ShapeDtypeStruct((m_p, dim_p), out_dtype),
        grid_spec=pltpu.PrefetchScalarGridSpec(
            num_scalar_prefetch=0,
            grid=(nblocks, nj),
            in_specs=[
                pl.BlockSpec((tm, dim_p), lambda i, j: (i, 0)),        # x token tile
                pl.BlockSpec((dim_p, 2 * tn), lambda i, j: (0, j)),    # [w1|w2] j-tile
                pl.BlockSpec((tn, dim_p), lambda i, j: (j, 0)),        # w3 j-tile
            ],
            out_specs=pl.BlockSpec((tm, dim_p), lambda i, j: (i, 0)),
            scratch_shapes=[pltpu.VMEM((tm, dim_p), jnp.float32)],
        ),
        compiler_params=pltpu.CompilerParams(
            dimension_semantics=("parallel", "arbitrary"),
            vmem_limit_bytes=int(vmem_limit),
        ),
        cost_estimate=cost,
    )(x_pad, w12, w3p)

    return out2d[:m, :dim]


def glu_forward(x, w12, w3p, *, cfg):
    """x: (..., dim); w12/w3p: prepared padded bf16 weights from prepare_glu_weights."""
    orig_shape = x.shape
    dim = cfg["dim"]
    x2d = x.reshape(-1, dim)
    m = x2d.shape[0]
    m_p8 = _round_up(max(m, 1), 8)
    out_itemsize = jnp.dtype(x.dtype).itemsize
    tm, nblocks = _choose_tm(m_p8, cfg, out_itemsize)
    out2d = _glu_call(x2d, w12, w3p,
                      dim_p=cfg["dim_p"], dim_inner_p=cfg["dim_inner_p"],
                      tn=cfg["tn"], tm=tm, nblocks=nblocks,
                      vmem_limit=cfg["budget"])
    return out2d.reshape(orig_shape)


def make_glu_params(key, dim, multiple_of=16, dtype=jnp.float32):
    """Parameters matching the PyTorch module (stored transposed, bias=False)."""
    dim_inner = int(2 * dim * 4 / 3)
    dim_inner = multiple_of * ((dim_inner + multiple_of - 1) // multiple_of)
    k1, k2, k3 = jax.random.split(key, 3)
    b1 = 1.0 / (dim ** 0.5)
    b3 = 1.0 / (dim_inner ** 0.5)
    w1 = jax.random.uniform(k1, (dim, dim_inner), dtype, minval=-b1, maxval=b1)
    w2 = jax.random.uniform(k2, (dim, dim_inner), dtype, minval=-b1, maxval=b1)
    w3 = jax.random.uniform(k3, (dim_inner, dim), dtype, minval=-b3, maxval=b3)
    return w1, w2, w3, dim_inner


def _reference(x, w1, w2, w3):
    return (jax.nn.sigmoid(x @ w1) * (x @ w2)) @ w3


if __name__ == "__main__":
    key = jax.random.PRNGKey(0)
    kx, kp, kx2, kp2 = jax.random.split(key, 4)

    # Case 1: small shapes (single reduction tile).
    batch, seq, dim = 2, 8, 32
    w1, w2, w3, dim_inner = make_glu_params(kp, dim)      # dim_inner = 96
    cfg = glu_config(dim, dim_inner)
    w12, w3p = prepare_glu_weights(w1, w2, w3, cfg)        # prepared once
    x = jax.random.normal(kx, (batch, seq, dim), dtype=jnp.float32)

    out = jax.block_until_ready(glu_forward(x, w12, w3p, cfg=cfg))
    ref = _reference(x, w1, w2, w3)
    assert out.shape == x.shape
    assert jnp.allclose(out, ref, atol=5e-2, rtol=5e-2), float(
        jnp.max(jnp.abs(out - ref)))

    # Case 2: larger dim so the dim_inner reduction axis has >1 tile
    # (exercises the accumulator init/accumulate/finalize path).
    dim2 = 256
    w1b, w2b, w3b, dim_inner2 = make_glu_params(kp2, dim2)  # dim_inner = 688
    cfg2 = glu_config(dim2, dim_inner2)
    w12b, w3pb = prepare_glu_weights(w1b, w2b, w3b, cfg2)
    x2 = jax.random.normal(kx2, (batch, seq, dim2), dtype=jnp.float32)

    out2 = jax.block_until_ready(glu_forward(x2, w12b, w3pb, cfg=cfg2))
    ref2 = _reference(x2, w1b, w2b, w3b)
    assert out2.shape == x2.shape
    assert jnp.allclose(out2, ref2, atol=6e-2, rtol=5e-2), float(
        jnp.max(jnp.abs(out2 - ref2)))

    print("KERNEL_OK")
</pallas_src>

<mosaic_0001>
module attributes {stable_mosaic.version = 11 : i64} {
  func.func @_glu_kernel(%arg0: i32, %arg1: i32, %arg2: memref<16x256xbf16, #tpu.memory_space<vmem>>, %arg3: memref<256x512xbf16, #tpu.memory_space<vmem>>, %arg4: memref<256x256xbf16, #tpu.memory_space<vmem>>, %arg5: memref<16x256xf32, #tpu.memory_space<vmem>>, %arg6: memref<16x256xf32, #tpu.memory_space<vmem>>) attributes {dimension_semantics = [#tpu.dimension_semantics<parallel>, #tpu.dimension_semantics<arbitrary>], iteration_bounds = array<i64: 1, 1>, scalar_prefetch = 0 : i64, scratch_operands = 1 : i64, tpu.core_type = #tpu.core_type<tc>, window_params = [{transform_indices = @transform_0, window_bounds = array<i64: 16, 256>}, {transform_indices = @transform_1, window_bounds = array<i64: 256, 512>}, {transform_indices = @transform_2, window_bounds = array<i64: 256, 256>}, {transform_indices = @transform_3, window_bounds = array<i64: 16, 256>}]} {
    %c0_i32 = arith.constant 0 : i32
    %0 = arith.cmpi eq, %arg1, %c0_i32 : i32
    %1 = arith.extui %0 : i1 to i32
    %c0_i32_0 = arith.constant 0 : i32
    %2 = arith.cmpi ne, %1, %c0_i32_0 : i32
    scf.if %2 {
      %cst_14 = arith.constant 0.000000e+00 : f32
      %23 = vector.broadcast %cst_14 : f32 to vector<16x256xf32>
      %c0_15 = arith.constant 0 : index
      %c0_16 = arith.constant 0 : index
      %24 = vector.load %arg6[%c0_15, %c0_16] : memref<16x256xf32, #tpu.memory_space<vmem>>, vector<16x256xf32>
      tpu.vector_store %arg6[%c0_15, %c0_16], %23 {strides = array<i32>} : memref<16x256xf32, #tpu.memory_space<vmem>>, vector<16x256xf32>,
    } else {
    }
    %c0 = arith.constant 0 : index
    %c0_1 = arith.constant 0 : index
    %3 = vector.load %arg2[%c0, %c0_1] : memref<16x256xbf16, #tpu.memory_space<vmem>>, vector<16x256xbf16>
    %c0_2 = arith.constant 0 : index
    %c0_3 = arith.constant 0 : index
    %4 = vector.load %arg3[%c0_2, %c0_3] : memref<256x512xbf16, #tpu.memory_space<vmem>>, vector<256x512xbf16>
    %cst = arith.constant dense<0.000000e+00> : vector<16x512xf32>
    %5 = tpu.matmul %3, %4, %cst {dimension_numbers = #tpu.dot_dimension_numbers<[1], [0], [0], [1], [0, 0, 1, 1], [], []>} : vector<16x256xbf16>, vector<256x512xbf16>, vector<16x512xf32> -> vector<16x512xf32>
    %6 = vector.extract_strided_slice %5 {offsets = [0, 0], sizes = [16, 256], strides = [1, 1]} : vector<16x512xf32> to vector<16x256xf32>
    %7 = arith.negf %6 : vector<16x256xf32>
    %8 = math.exp %7 : vector<16x256xf32>
    %cst_4 = arith.constant 1.000000e+00 : f32
    %9 = vector.broadcast %cst_4 : f32 to vector<16x256xf32>
    %10 = arith.addf %9, %8 : vector<16x256xf32>
    %11 = arith.divf %9, %10 : vector<16x256xf32>
    %12 = vector.extract_strided_slice %5 {offsets = [0, 256], sizes = [16, 256], strides = [1, 1]} : vector<16x512xf32> to vector<16x256xf32>
    %13 = arith.mulf %11, %12 : vector<16x256xf32>
    %c0_5 = arith.constant 0 : index
    %c0_6 = arith.constant 0 : index
    %14 = vector.load %arg6[%c0_5, %c0_6] : memref<16x256xf32, #tpu.memory_space<vmem>>, vector<16x256xf32>
    %15 = arith.truncf %13 : vector<16x256xf32> to vector<16x256xbf16>
    %c0_7 = arith.constant 0 : index
    %c0_8 = arith.constant 0 : index
    %16 = vector.load %arg4[%c0_7, %c0_8] : memref<256x256xbf16, #tpu.memory_space<vmem>>, vector<256x256xbf16>
    %cst_9 = arith.constant dense<0.000000e+00> : vector<16x256xf32>
    %17 = tpu.matmul %15, %16, %cst_9 {dimension_numbers = #tpu.dot_dimension_numbers<[1], [0], [0], [1], [0, 0, 1, 1], [], []>} : vector<16x256xbf16>, vector<256x256xbf16>, vector<16x256xf32> -> vector<16x256xf32>
    %18 = arith.addf %14, %17 : vector<16x256xf32>
    %c0_10 = arith.constant 0 : index
    %c0_11 = arith.constant 0 : index
    %19 = vector.load %arg6[%c0_10, %c0_11] : memref<16x256xf32, #tpu.memory_space<vmem>>, vector<16x256xf32>
    tpu.vector_store %arg6[%c0_10, %c0_11], %18 {strides = array<i32>} : memref<16x256xf32, #tpu.memory_space<vmem>>, vector<16x256xf32>,
    %c0_i32_12 = arith.constant 0 : i32
    %20 = arith.cmpi eq, %arg1, %c0_i32_12 : i32
    %21 = arith.extui %20 : i1 to i32
    %c0_i32_13 = arith.constant 0 : i32
    %22 = arith.cmpi ne, %21, %c0_i32_13 : i32
    scf.if %22 {
      %c0_14 = arith.constant 0 : index
      %c0_15 = arith.constant 0 : index
      %23 = vector.load %arg6[%c0_14, %c0_15] : memref<16x256xf32, #tpu.memory_space<vmem>>, vector<16x256xf32>
      %c0_16 = arith.constant 0 : index
      %c0_17 = arith.constant 0 : index
      %24 = vector.load %arg5[%c0_16, %c0_17] : memref<16x256xf32, #tpu.memory_space<vmem>>, vector<16x256xf32>
      tpu.vector_store %arg5[%c0_16, %c0_17], %23 {strides = array<i32>} : memref<16x256xf32, #tpu.memory_space<vmem>>, vector<16x256xf32>,
    } else {
    }
    return
  }
  func.func @transform_0(%arg0: i32, %arg1: i32) -> (i32, i32) {
    %c0_i32 = arith.constant 0 : i32
    %c0_i32_0 = arith.constant 0 : i32
    return %arg0, %c0_i32 : i32, i32
  }
  func.func @transform_1(%arg0: i32, %arg1: i32) -> (i32, i32) {
    %c0_i32 = arith.constant 0 : i32
    %c0_i32_0 = arith.constant 0 : i32
    return %c0_i32, %arg1 : i32, i32
  }
  func.func @transform_2(%arg0: i32, %arg1: i32) -> (i32, i32) {
    %c0_i32 = arith.constant 0 : i32
    %c0_i32_0 = arith.constant 0 : i32
    return %arg1, %c0_i32 : i32, i32
  }
  func.func @transform_3(%arg0: i32, %arg1: i32) -> (i32, i32) {
    %c0_i32 = arith.constant 0 : i32
    %c0_i32_0 = arith.constant 0 : i32
    return %arg0, %c0_i32 : i32, i32
  }
}

</mosaic_0001>

<llo_original>
// kernel: _glu_call.1
$region0: #{_glu_call.1}
  #allocation0 [shape = 'u32[]', space=smem, size = 0x4, offset = 0x4, fixed_abs, tag = 'smem constant byte address 0x4 - core index']
  #allocation1 [shape = 'u32[72,128]{1,0:T(1,128)}', space=vmem, size = 0x9000, scoped, tag = 'internal scratch']
  #allocation2 [shape = 'f32[16,256]{1,0:T(8,128)}', space=vmem, size = 0x4000, scoped, tag = 'scratch operand']
  %s0 = inlined_call_operand.vmem [shape: bf16[16,256], index: 0, kind: input, shape index: {}]
  %s1 = inlined_call_operand.hbm [shape: bf16[256,512], index: 1, kind: input, shape index: {}]
  %s2 = inlined_call_operand.hbm [shape: bf16[256,256], index: 2, kind: input, shape index: {}]
  %s3 = inlined_call_operand.vmem [shape: f32[16,256], index: 3, kind: output, shape index: {}]
  %s4 = sld [smem:[#allocation0]]
  $region38: #{_glu_call.1} parent=0
    _
  %s6 = ssub.s32 1, %s4
  %s7 = scalar_select 0, %s6, %s4
  $region1: #{_glu_call.1} parent=0
    #allocation3 [shape = 'u8[262144]{0}', space=vmem, size = 0x40000, scoped, tag = 'input window, operand 1, single buffered']
    #allocation4 [shape = 's32[1]{0}', space=sflag, size = 0x4, scoped, tag = 'scoped memory for _glu_call.1']
    #allocation5 [shape = 'u8[131072]{0}', space=vmem, size = 0x20000, scoped, tag = 'input window, operand 2, single buffered']
    #allocation6 [shape = 's32[1]{0}', space=sflag, size = 0x4, scoped, tag = 'scoped memory for _glu_call.1']
    %8 = vsyncpa [#allocation4], 0
    %9 = vsyncpa [#allocation6], 0
    // Predicated region
    $region2: #{_glu_call.1} parent=1 // pred_check
      _
    $region3: #{_glu_call.1} parent=1 // pred_check_branch
      %11 = sbr.rel (0) target = $region5
    $region4: #{_glu_call.1} parent=1 // pred_region
      _
    $region5: #{_glu_call.1} parent=1 // pred_fallthru
      _
    // Predicated region
    $region6: #{_glu_call.1} parent=1 // pred_check
      _
    $region7: #{_glu_call.1} parent=1 // pred_check_branch
      %13 = sbr.rel (0) target = $region9
    $region8: #{_glu_call.1} parent=1 // pred_region
      %15 = vsyncadd [#allocation4], 0
      %s16 = sshll.u32 %s1, 4
      %s17 = int_to_ptr.hbm [resolvable:$true] %s16
      %s18 = sshll.u32 [#allocation3], 4
      %s19 = int_to_ptr.vmem [resolvable:$true] %s18
      %24 = dma.hbm_to_vmem [thread:$0]  %s17, 8192, %s19, [#allocation4], 256, 256, 16
    $region9: #{_glu_call.1} parent=1 // pred_fallthru
      _
    // Predicated region
    $region10: #{_glu_call.1} parent=1 // pred_check
      _
    $region11: #{_glu_call.1} parent=1 // pred_check_branch
      %26 = sbr.rel (0) target = $region13
    $region12: #{_glu_call.1} parent=1 // pred_region
      %28 = vsyncadd [#allocation6], 0
      %s29 = sshll.u32 %s2, 4
      %s30 = int_to_ptr.hbm [resolvable:$true] %s29
      %s31 = sshll.u32 [#allocation5], 4
      %s32 = int_to_ptr.vmem [resolvable:$true] %s31
      %37 = dma.hbm_to_vmem [thread:$0]  %s30, 4096, %s32, [#allocation6], 128, 128, 8
    $region13: #{_glu_call.1} parent=1 // pred_fallthru
      _
    // Predicated region
    $region14: #{_glu_call.1} parent=1 // pred_check
      _
    $region15: #{_glu_call.1} parent=1 // pred_check_branch
      %39 = sbr.rel (0) target = $region17
    $region16: #{_glu_call.1} parent=1 // pred_region
      %41 = dma.done [#allocation4], 8192
    $region17: #{_glu_call.1} parent=1 // pred_fallthru
      _
    // Predicated region
    $region18: #{_glu_call.1} parent=1 // pred_check
      _
    $region19: #{_glu_call.1} parent=1 // pred_check_branch
      %43 = sbr.rel (0) target = $region21
    $region20: #{_glu_call.1} parent=1 // pred_region
      %45 = dma.done [#allocation6], 4096
    $region21: #{_glu_call.1} parent=1 // pred_fallthru
      _
    %p46 = scmp.eq.s32.totalorder 0, 0
    // Predicated region
    $region22: #{_glu_call.1} parent=1 // pred_check
      %p47 = pneg %p46
    $region23: #{_glu_call.1} parent=1 // pred_check_branch
      %49 = sbr.rel (%p47) target = $region25
    $region24: #{_glu_call.1} parent=1 // pred_region
      %50 = vst [vmem:[#allocation2] sm:$0xff] 0.0
      %51 = vst [vmem:[#allocation2 + $0x8] sm:$0xff] 0.0
      %52 = vst [vmem:[#allocation2 + $0x10] sm:$0xff] 0.0
      %53 = vst [vmem:[#allocation2 + $0x18] sm:$0xff] 0.0
    $region25: #{_glu_call.1} parent=1 // pred_fallthru
      _
    %v54 = vld [vmem:[%s0] sm:$0xff]
    %v55 = vld [vmem:[%s0 + $0x8] sm:$0xff]
    %v56 = vld [vmem:[#allocation3] sm:$0xff]
    %v57 = vld [vmem:[#allocation3 + $0x8] sm:$0xff]
    %v58 = vld [vmem:[#allocation3 + $0x10] sm:$0xff]
    %v59 = vld [vmem:[#allocation3 + $0x18] sm:$0xff]
    %v60 = vld [vmem:[#allocation3 + $0x20] sm:$0xff]
    %v61 = vld [vmem:[#allocation3 + $0x28] sm:$0xff]
    %v62 = vld [vmem:[#allocation3 + $0x30] sm:$0xff]
    %v63 = vld [vmem:[#allocation3 + $0x38] sm:$0xff]
    %v64 = vld [vmem:[#allocation3 + $0x40] sm:$0xff]
    %v65 = vld [vmem:[#allocation3 + $0x48] sm:$0xff]
    %v66 = vld [vmem:[#allocation3 + $0x50] sm:$0xff]
    %v67 = vld [vmem:[#allocation3 + $0x58] sm:$0xff]
    %v68 = vld [vmem:[#allocation3 + $0x60] sm:$0xff]
    %v69 = vld [vmem:[#allocation3 + $0x68] sm:$0xff]
    %v70 = vld [vmem:[#allocation3 + $0x70] sm:$0xff]
    %v71 = vld [vmem:[#allocation3 + $0x78] sm:$0xff]
    %v72 = vld [vmem:[#allocation3 + $0x80] sm:$0xff]
    %v73 = vld [vmem:[#allocation3 + $0x88] sm:$0xff]
    %v74 = vld [vmem:[#allocation3 + $0x90] sm:$0xff]
    %v75 = vld [vmem:[#allocation3 + $0x98] sm:$0xff]
    %v76 = vld [vmem:[#allocation3 + $0xa0] sm:$0xff]
    %v77 = vld [vmem:[#allocation3 + $0xa8] sm:$0xff]
    %v78 = vld [vmem:[#allocation3 + $0xb0] sm:$0xff]
    %v79 = vld [vmem:[#allocation3 + $0xb8] sm:$0xff]
    %v80 = vld [vmem:[#allocation3 + $0xc0] sm:$0xff]
    %v81 = vld [vmem:[#allocation3 + $0xc8] sm:$0xff]
    %v82 = vld [vmem:[#allocation3 + $0xd0] sm:$0xff]
    %v83 = vld [vmem:[#allocation3 + $0xd8] sm:$0xff]
    %v84 = vld [vmem:[#allocation3 + $0xe0] sm:$0xff]
    %v85 = vld [vmem:[#allocation3 + $0xe8] sm:$0xff]
    %v86 = vld [vmem:[#allocation3 + $0xf0] sm:$0xff]
    %v87 = vld [vmem:[#allocation3 + $0xf8] sm:$0xff]
    %v88 = vld [vmem:[#allocation3 + $0x100] sm:$0xff]
    %v89 = vld [vmem:[#allocation3 + $0x108] sm:$0xff]
    %v90 = vld [vmem:[#allocation3 + $0x110] sm:$0xff]
    %v91 = vld [vmem:[#allocation3 + $0x118] sm:$0xff]
    %v92 = vld [vmem:[#allocation3 + $0x120] sm:$0xff]
    %v93 = vld [vmem:[#allocation3 + $0x128] sm:$0xff]
    %v94 = vld [vmem:[#allocation3 + $0x130] sm:$0xff]
    %v95 = vld [vmem:[#allocation3 + $0x138] sm:$0xff]
    %v96 = vld [vmem:[#allocation3 + $0x140] sm:$0xff]
    %v97 = vld [vmem:[#allocation3 + $0x148] sm:$0xff]
    %v98 = vld [vmem:[#allocation3 + $0x150] sm:$0xff]
    %v99 = vld [vmem:[#allocation3 + $0x158] sm:$0xff]
    %v100 = vld [vmem:[#allocation3 + $0x160] sm:$0xff]
    %v101 = vld [vmem:[#allocation3 + $0x168] sm:$0xff]
    %v102 = vld [vmem:[#allocation3 + $0x170] sm:$0xff]
    %v103 = vld [vmem:[#allocation3 + $0x178] sm:$0xff]
    %v104 = vld [vmem:[#allocation3 + $0x180] sm:$0xff]
    %v105 = vld [vmem:[#allocation3 + $0x188] sm:$0xff]
    %v106 = vld [vmem:[#allocation3 + $0x190] sm:$0xff]
    %v107 = vld [vmem:[#allocation3 + $0x198] sm:$0xff]
    %v108 = vld [vmem:[#allocation3 + $0x1a0] sm:$0xff]
    %v109 = vld [vmem:[#allocation3 + $0x1a8] sm:$0xff]
    %v110 = vld [vmem:[#allocation3 + $0x1b0] sm:$0xff]
    %v111 = vld [vmem:[#allocation3 + $0x1b8] sm:$0xff]
    %v112 = vld [vmem:[#allocation3 + $0x1c0] sm:$0xff]
    %v113 = vld [vmem:[#allocation3 + $0x1c8] sm:$0xff]
    %v114 = vld [vmem:[#allocation3 + $0x1d0] sm:$0xff]
    %v115 = vld [vmem:[#allocation3 + $0x1d8] sm:$0xff]
    %v116 = vld [vmem:[#allocation3 + $0x1e0] sm:$0xff]
    %v117 = vld [vmem:[#allocation3 + $0x1e8] sm:$0xff]
    %v118 = vld [vmem:[#allocation3 + $0x1f0] sm:$0xff]
    %v119 = vld [vmem:[#allocation3 + $0x1f8] sm:$0xff]
    %v122 = vunpack.c.l.b16 %v54
    %v123 = vunpack.c.h.b16 %v54
    %v124 = vunpack.c.l.b16 %v55
    %v125 = vunpack.c.h.b16 %v55
    %v126 = vpack.c.b16 %v124, %v122
    %v127 = vpack.c.b16 %v125, %v123
    %v194 = vunpack.c.l.b16 %v56
    %v195 = vunpack.c.h.b16 %v56
    %v196 = vunpack.c.l.b16 %v57
    %v197 = vunpack.c.h.b16 %v57
    %v198 = vunpack.c.l.b16 %v58
    %v199 = vunpack.c.h.b16 %v58
    %v200 = vunpack.c.l.b16 %v59
    %v201 = vunpack.c.h.b16 %v59
    %v202 = vunpack.c.l.b16 %v60
    %v203 = vunpack.c.h.b16 %v60
    %v204 = vunpack.c.l.b16 %v61
    %v205 = vunpack.c.h.b16 %v61
    %v206 = vunpack.c.l.b16 %v62
    %v207 = vunpack.c.h.b16 %v62
    %v208 = vunpack.c.l.b16 %v63
    %v209 = vunpack.c.h.b16 %v63
    %v210 = vunpack.c.l.b16 %v64
    %v211 = vunpack.c.h.b16 %v64
    %v212 = vunpack.c.l.b16 %v65
    %v213 = vunpack.c.h.b16 %v65
    %v214 = vunpack.c.l.b16 %v66
    %v215 = vunpack.c.h.b16 %v66
    %v216 = vunpack.c.l.b16 %v67
    %v217 = vunpack.c.h.b16 %v67
    %v218 = vunpack.c.l.b16 %v68
    %v219 = vunpack.c.h.b16 %v68
    %v220 = vunpack.c.l.b16 %v69
    %v221 = vunpack.c.h.b16 %v69
    %v222 = vunpack.c.l.b16 %v70
    %v223 = vunpack.c.h.b16 %v70
    %v224 = vunpack.c.l.b16 %v71
    %v225 = vunpack.c.h.b16 %v71
    %v226 = vunpack.c.l.b16 %v72
    %v227 = vunpack.c.h.b16 %v72
    %v228 = vunpack.c.l.b16 %v73
    %v229 = vunpack.c.h.b16 %v73
    %v230 = vunpack.c.l.b16 %v74
    %v231 = vunpack.c.h.b16 %v74
    %v232 = vunpack.c.l.b16 %v75
    %v233 = vunpack.c.h.b16 %v75
    %v234 = vunpack.c.l.b16 %v76
    %v235 = vunpack.c.h.b16 %v76
    %v236 = vunpack.c.l.b16 %v77
    %v237 = vunpack.c.h.b16 %v77
    %v238 = vunpack.c.l.b16 %v78
    %v239 = vunpack.c.h.b16 %v78
    %v240 = vunpack.c.l.b16 %v79
    %v241 = vunpack.c.h.b16 %v79
    %v242 = vunpack.c.l.b16 %v80
    %v243 = vunpack.c.h.b16 %v80
    %v244 = vunpack.c.l.b16 %v81
    %v245 = vunpack.c.h.b16 %v81
    %v246 = vunpack.c.l.b16 %v82
    %v247 = vunpack.c.h.b16 %v82
    %v248 = vunpack.c.l.b16 %v83
    %v249 = vunpack.c.h.b16 %v83
    %v250 = vunpack.c.l.b16 %v84
    %v251 = vunpack.c.h.b16 %v84
    %v252 = vunpack.c.l.b16 %v85
    %v253 = vunpack.c.h.b16 %v85
    %v254 = vunpack.c.l.b16 %v86
    %v255 = vunpack.c.h.b16 %v86
    %v256 = vunpack.c.l.b16 %v87
    %v257 = vunpack.c.h.b16 %v87
    %v258 = vunpack.c.l.b16 %v88
    %v259 = vunpack.c.h.b16 %v88
    %v260 = vunpack.c.l.b16 %v89
    %v261 = vunpack.c.h.b16 %v89
    %v262 = vunpack.c.l.b16 %v90
    %v263 = vunpack.c.h.b16 %v90
    %v264 = vunpack.c.l.b16 %v91
    %v265 = vunpack.c.h.b16 %v91
    %v266 = vunpack.c.l.b16 %v92
    %v267 = vunpack.c.h.b16 %v92
    %v268 = vunpack.c.l.b16 %v93
    %v269 = vunpack.c.h.b16 %v93
    %v270 = vunpack.c.l.b16 %v94
    %v271 = vunpack.c.h.b16 %v94
    %v272 = vunpack.c.l.b16 %v95
    %v273 = vunpack.c.h.b16 %v95
    %v274 = vunpack.c.l.b16 %v96
    %v275 = vunpack.c.h.b16 %v96
    %v276 = vunpack.c.l.b16 %v97
    %v277 = vunpack.c.h.b16 %v97
    %v278 = vunpack.c.l.b16 %v98
    %v279 = vunpack.c.h.b16 %v98
    %v280 = vunpack.c.l.b16 %v99
    %v281 = vunpack.c.h.b16 %v99
    %v282 = vunpack.c.l.b16 %v100
    %v283 = vunpack.c.h.b16 %v100
    %v284 = vunpack.c.l.b16 %v101
    %v285 = vunpack.c.h.b16 %v101
    %v286 = vunpack.c.l.b16 %v102
    %v287 = vunpack.c.h.b16 %v102
    %v288 = vunpack.c.l.b16 %v103
    %v289 = vunpack.c.h.b16 %v103
    %v290 = vunpack.c.l.b16 %v104
    %v291 = vunpack.c.h.b16 %v104
    %v292 = vunpack.c.l.b16 %v105
    %v293 = vunpack.c.h.b16 %v105
    %v294 = vunpack.c.l.b16 %v106
    %v295 = vunpack.c.h.b16 %v106
    %v296 = vunpack.c.l.b16 %v107
    %v297 = vunpack.c.h.b16 %v107
    %v298 = vunpack.c.l.b16 %v108
    %v299 = vunpack.c.h.b16 %v108
    %v300 = vunpack.c.l.b16 %v109
    %v301 = vunpack.c.h.b16 %v109
    %v302 = vunpack.c.l.b16 %v110
    %v303 = vunpack.c.h.b16 %v110
    %v304 = vunpack.c.l.b16 %v111
    %v305 = vunpack.c.h.b16 %v111
    %v306 = vunpack.c.l.b16 %v112
    %v307 = vunpack.c.h.b16 %v112
    %v308 = vunpack.c.l.b16 %v113
    %v309 = vunpack.c.h.b16 %v113
    %v310 = vunpack.c.l.b16 %v114
    %v311 = vunpack.c.h.b16 %v114
    %v312 = vunpack.c.l.b16 %v115
    %v313 = vunpack.c.h.b16 %v115
    %v314 = vunpack.c.l.b16 %v116
    %v315 = vunpack.c.h.b16 %v116
    %v316 = vunpack.c.l.b16 %v117
    %v317 = vunpack.c.h.b16 %v117
    %v318 = vunpack.c.l.b16 %v118
    %v319 = vunpack.c.h.b16 %v118
    %v320 = vunpack.c.l.b16 %v119
    %v321 = vunpack.c.h.b16 %v119
    %v322 = vpack.c.b16 %v198, %v194
    %v323 = vpack.c.b16 %v199, %v195
    %v324 = vpack.c.b16 %v200, %v196
    %v325 = vpack.c.b16 %v201, %v197
    %v326 = vpack.c.b16 %v206, %v202
    %v327 = vpack.c.b16 %v207, %v203
    %v328 = vpack.c.b16 %v208, %v204
    %v329 = vpack.c.b16 %v209, %v205
    %v330 = vpack.c.b16 %v214, %v210
    %v331 = vpack.c.b16 %v215, %v211
    %v332 = vpack.c.b16 %v216, %v212
    %v333 = vpack.c.b16 %v217, %v213
    %v334 = vpack.c.b16 %v222, %v218
    %v335 = vpack.c.b16 %v223, %v219
    %v336 = vpack.c.b16 %v224, %v220
    %v337 = vpack.c.b16 %v225, %v221
    %v338 = vpack.c.b16 %v230, %v226
    %v339 = vpack.c.b16 %v231, %v227
    %v340 = vpack.c.b16 %v232, %v228
    %v341 = vpack.c.b16 %v233, %v229
    %v342 = vpack.c.b16 %v238, %v234
    %v343 = vpack.c.b16 %v239, %v235
    %v344 = vpack.c.b16 %v240, %v236
    %v345 = vpack.c.b16 %v241, %v237
    %v346 = vpack.c.b16 %v246, %v242
    %v347 = vpack.c.b16 %v247, %v243
    %v348 = vpack.c.b16 %v248, %v244
    %v349 = vpack.c.b16 %v249, %v245
    %v350 = vpack.c.b16 %v254, %v250
    %v351 = vpack.c.b16 %v255, %v251
    %v352 = vpack.c.b16 %v256, %v252
    %v353 = vpack.c.b16 %v257, %v253
    %v354 = vpack.c.b16 %v262, %v258
    %v355 = vpack.c.b16 %v263, %v259
    %v356 = vpack.c.b16 %v264, %v260
    %v357 = vpack.c.b16 %v265, %v261
    %v358 = vpack.c.b16 %v270, %v266
    %v359 = vpack.c.b16 %v271, %v267
    %v360 = vpack.c.b16 %v272, %v268
    %v361 = vpack.c.b16 %v273, %v269
    %v362 = vpack.c.b16 %v278, %v274
    %v363 = vpack.c.b16 %v279, %v275
    %v364 = vpack.c.b16 %v280, %v276
    %v365 = vpack.c.b16 %v281, %v277
    %v366 = vpack.c.b16 %v286, %v282
    %v367 = vpack.c.b16 %v287, %v283
    %v368 = vpack.c.b16 %v288, %v284
    %v369 = vpack.c.b16 %v289, %v285
    %v370 = vpack.c.b16 %v294, %v290
    %v371 = vpack.c.b16 %v295, %v291
    %v372 = vpack.c.b16 %v296, %v292
    %v373 = vpack.c.b16 %v297, %v293
    %v374 = vpack.c.b16 %v302, %v298
    %v375 = vpack.c.b16 %v303, %v299
    %v376 = vpack.c.b16 %v304, %v300
    %v377 = vpack.c.b16 %v305, %v301
    %v378 = vpack.c.b16 %v310, %v306
    %v379 = vpack.c.b16 %v311, %v307
    %v380 = vpack.c.b16 %v312, %v308
    %v381 = vpack.c.b16 %v313, %v309
    %v382 = vpack.c.b16 %v318, %v314
    %v383 = vpack.c.b16 %v319, %v315
    %v384 = vpack.c.b16 %v320, %v316
    %v385 = vpack.c.b16 %v321, %v317
    %450 = vmatpush.bf16.msra.mxu0 %v350
    %451 = vmatpush.bf16.msra.mxu0 %v346
    %452 = vmatpush.bf16.msra.mxu0 %v342
    %453 = vmatpush.bf16.msra.mxu0 %v338
    %454 = vmatpush.bf16.msra.mxu0 %v334
    %455 = vmatpush.bf16.msra.mxu0 %v330
    %456 = vmatpush.bf16.msra.mxu0 %v326
    %457 = vmatpush.bf16.msra.mxu0 %v322
    %458 = vmatmul.bf16.gmra.mxu0 %v126
    %v459 = vpop.f32.mrf.mxu0
    %v460 = vadd.f32 0.0, %v459
    %v461 = vpop.f32.mrf.mxu0
    %v462 = vadd.f32 0.0, %v461
    %463 = vdwg.mxu0
    %464 = vmatpush.bf16.msra.mxu0 %v382
    %465 = vmatpush.bf16.msra.mxu0 %v378
    %466 = vmatpush.bf16.msra.mxu0 %v374
    %467 = vmatpush.bf16.msra.mxu0 %v370
    %468 = vmatpush.bf16.msra.mxu0 %v366
    %469 = vmatpush.bf16.msra.mxu0 %v362
    %470 = vmatpush.bf16.msra.mxu0 %v358
    %471 = vmatpush.bf16.msra.mxu0 %v354
    %472 = vmatmul.bf16.gmra.mxu0 %v127
    %v473 = vpop.f32.mrf.mxu0
    %v474 = vadd.f32 %v460, %v473
    %v475 = vpop.f32.mrf.mxu0
    %v476 = vadd.f32 %v462, %v475
    %477 = vdwg.mxu0
    %478 = vmatpush.bf16.msra.mxu0 %v351
    %479 = vmatpush.bf16.msra.mxu0 %v347
    %480 = vmatpush.bf16.msra.mxu0 %v343
    %481 = vmatpush.bf16.msra.mxu0 %v339
    %482 = vmatpush.bf16.msra.mxu0 %v335
    %483 = vmatpush.bf16.msra.mxu0 %v331
    %484 = vmatpush.bf16.msra.mxu0 %v327
    %485 = vmatpush.bf16.msra.mxu0 %v323
    %486 = vmatmul.bf16.gmra.mxu0 %v126
    %v487 = vpop.f32.mrf.mxu0
    %v488 = vadd.f32 0.0, %v487
    %v489 = vpop.f32.mrf.mxu0
    %v490 = vadd.f32 0.0, %v489
    %491 = vdwg.mxu0
    %492 = vmatpush.bf16.msra.mxu0 %v383
    %493 = vmatpush.bf16.msra.mxu0 %v379
    %494 = vmatpush.bf16.msra.mxu0 %v375
    %495 = vmatpush.bf16.msra.mxu0 %v371
    %496 = vmatpush.bf16.msra.mxu0 %v367
    %497 = vmatpush.bf16.msra.mxu0 %v363
    %498 = vmatpush.bf16.msra.mxu0 %v359
    %499 = vmatpush.bf16.msra.mxu0 %v355
    %500 = vmatmul.bf16.gmra.mxu0 %v127
    %v501 = vpop.f32.mrf.mxu0
    %v502 = vadd.f32 %v488, %v501
    %v503 = vpop.f32.mrf.mxu0
    %v504 = vadd.f32 %v490, %v503
    %505 = vdwg.mxu0
    %506 = vmatpush.bf16.msra.mxu0 %v352
    %507 = vmatpush.bf16.msra.mxu0 %v348
    %508 = vmatpush.bf16.msra.mxu0 %v344
    %509 = vmatpush.bf16.msra.mxu0 %v340
    %510 = vmatpush.bf16.msra.mxu0 %v336
    %511 = vmatpush.bf16.msra.mxu0 %v332
    %512 = vmatpush.bf16.msra.mxu0 %v328
    %513 = vmatpush.bf16.msra.mxu0 %v324
    %514 = vmatmul.bf16.gmra.mxu0 %v126
    %v515 = vpop.f32.mrf.mxu0
    %v516 = vadd.f32 0.0, %v515
    %v517 = vpop.f32.mrf.mxu0
    %v518 = vadd.f32 0.0, %v517
    %519 = vdwg.mxu0
    %520 = vmatpush.bf16.msra.mxu0 %v384
    %521 = vmatpush.bf16.msra.mxu0 %v380
    %522 = vmatpush.bf16.msra.mxu0 %v376
    %523 = vmatpush.bf16.msra.mxu0 %v372
    %524 = vmatpush.bf16.msra.mxu0 %v368
    %525 = vmatpush.bf16.msra.mxu0 %v364
    %526 = vmatpush.bf16.msra.mxu0 %v360
    %527 = vmatpush.bf16.msra.mxu0 %v356
    %528 = vmatmul.bf16.gmra.mxu0 %v127
    %v529 = vpop.f32.mrf.mxu0
    %v530 = vadd.f32 %v516, %v529
    %v531 = vpop.f32.mrf.mxu0
    %v532 = vadd.f32 %v518, %v531
    %533 = vdwg.mxu0
    %534 = vmatpush.bf16.msra.mxu0 %v353
    %535 = vmatpush.bf16.msra.mxu0 %v349
    %536 = vmatpush.bf16.msra.mxu0 %v345
    %537 = vmatpush.bf16.msra.mxu0 %v341
    %538 = vmatpush.bf16.msra.mxu0 %v337
    %539 = vmatpush.bf16.msra.mxu0 %v333
    %540 = vmatpush.bf16.msra.mxu0 %v329
    %541 = vmatpush.bf16.msra.mxu0 %v325
    %542 = vmatmul.bf16.gmra.mxu0 %v126
    %v543 = vpop.f32.mrf.mxu0
    %v544 = vadd.f32 0.0, %v543
    %v545 = vpop.f32.mrf.mxu0
    %v546 = vadd.f32 0.0, %v545
    %547 = vdwg.mxu0
    %548 = vmatpush.bf16.msra.mxu0 %v385
    %549 = vmatpush.bf16.msra.mxu0 %v381
    %550 = vmatpush.bf16.msra.mxu0 %v377
    %551 = vmatpush.bf16.msra.mxu0 %v373
    %552 = vmatpush.bf16.msra.mxu0 %v369
    %553 = vmatpush.bf16.msra.mxu0 %v365
    %554 = vmatpush.bf16.msra.mxu0 %v361
    %555 = vmatpush.bf16.msra.mxu0 %v357
    %556 = vmatmul.bf16.gmra.mxu0 %v127
    %v557 = vpop.f32.mrf.mxu0
    %v558 = vadd.f32 %v544, %v557
    %v559 = vpop.f32.mrf.mxu0
    %v560 = vadd.f32 %v546, %v559
    %561 = vdwg.mxu0
    %v562 = vxor.u32 %v474, 2147483648
    %v563 = vxor.u32 %v502, 2147483648
    %v564 = vxor.u32 %v476, 2147483648
    %v565 = vxor.u32 %v504, 2147483648
    %v566 = vmul.f32 %v562, 1.442695
    %v567 = vpow.pop %v566
    %v568 = vmul.f32 %v563, 1.442695
    %v569 = vpow.pop %v568
    %v570 = vmul.f32 %v564, 1.442695
    %v571 = vpow.pop %v570
    %v572 = vmul.f32 %v565, 1.442695
    %v573 = vpow.pop %v572
    %v574 = vadd.f32 %v567, 1.0
    %v575 = vadd.f32 %v569, 1.0
    %v576 = vadd.f32 %v571, 1.0
    %v577 = vadd.f32 %v573, 1.0
    %v578 = vrcp.pop %v574
    %v579 = vmul.f32 %v574, %v578
    %v580 = vsub.f32 1.0, %v579
    %v581 = vmul.f32 %v578, %v580
    %v582 = vadd.f32 %v578, %v581
    %vm583 = vweird.f32 %v574
    %vm584 = vweird.f32 %v578
    %vm585 = vmor %vm583, %vm584
    %v586 = vsel %vm585, %v578, %v582
    %v587 = vand.u32 2147483647, %v574
    %vm588 = vcmp.eq.f32.partialorder %v587, 8.507059e+37
    %v589 = vand.u32 %v574, 2147483648
    %v590 = vor.u32 1.1754944e-38, %v589
    %v591 = vsel %vm588, %v590, %v586
    %v592 = vmul.f32 1.0, %v591
    %v593 = vrcp.pop %v575
    %v594 = vmul.f32 %v575, %v593
    %v595 = vsub.f32 1.0, %v594
    %v596 = vmul.f32 %v593, %v595
    %v597 = vadd.f32 %v593, %v596
    %vm598 = vweird.f32 %v575
    %vm599 = vweird.f32 %v593
    %vm600 = vmor %vm598, %vm599
    %v601 = vsel %vm600, %v593, %v597
    %v602 = vand.u32 2147483647, %v575
    %vm603 = vcmp.eq.f32.partialorder %v602, 8.507059e+37
    %v604 = vand.u32 %v575, 2147483648
    %v605 = vor.u32 1.1754944e-38, %v604
    %v606 = vsel %vm603, %v605, %v601
    %v607 = vmul.f32 1.0, %v606
    %v608 = vrcp.pop %v576
    %v609 = vmul.f32 %v576, %v608
    %v610 = vsub.f32 1.0, %v609
    %v611 = vmul.f32 %v608, %v610
    %v612 = vadd.f32 %v608, %v611
    %vm613 = vweird.f32 %v576
    %vm614 = vweird.f32 %v608
    %vm615 = vmor %vm613, %vm614
    %v616 = vsel %vm615, %v608, %v612
    %v617 = vand.u32 2147483647, %v576
    %vm618 = vcmp.eq.f32.partialorder %v617, 8.507059e+37
    %v619 = vand.u32 %v576, 2147483648
    %v620 = vor.u32 1.1754944e-38, %v619
    %v621 = vsel %vm618, %v620, %v616
    %v622 = vmul.f32 1.0, %v621
    %v623 = vrcp.pop %v577
    %v624 = vmul.f32 %v577, %v623
    %v625 = vsub.f32 1.0, %v624
    %v626 = vmul.f32 %v623, %v625
    %v627 = vadd.f32 %v623, %v626
    %vm628 = vweird.f32 %v577
    %vm629 = vweird.f32 %v623
    %vm630 = vmor %vm628, %vm629
    %v631 = vsel %vm630, %v623, %v627
    %v632 = vand.u32 2147483647, %v577
    %vm633 = vcmp.eq.f32.partialorder %v632, 8.507059e+37
    %v634 = vand.u32 %v577, 2147483648
    %v635 = vor.u32 1.1754944e-38, %v634
    %v636 = vsel %vm633, %v635, %v631
    %v637 = vmul.f32 1.0, %v636
    %v638 = vmul.f32 %v592, %v530
    %v639 = vmul.f32 %v607, %v558
    %v640 = vmul.f32 %v622, %v532
    %v641 = vmul.f32 %v637, %v560
    %v642 = vld [vmem:[#allocation2] sm:$0xff]
    %v643 = vld [vmem:[#allocation2 + $0x8] sm:$0xff]
    %v644 = vld [vmem:[#allocation2 + $0x10] sm:$0xff]
    %v645 = vld [vmem:[#allocation2 + $0x18] sm:$0xff]
    %v646 = vpack.c.bf16 %v640, %v638
    %v647 = vpack.c.bf16 %v641, %v639
    %v648 = vld [vmem:[#allocation5] sm:$0xff]
    %v649 = vld [vmem:[#allocation5 + $0x8] sm:$0xff]
    %v650 = vld [vmem:[#allocation5 + $0x10] sm:$0xff]
    %v651 = vld [vmem:[#allocation5 + $0x18] sm:$0xff]
    %v652 = vld [vmem:[#allocation5 + $0x20] sm:$0xff]
    %v653 = vld [vmem:[#allocation5 + $0x28] sm:$0xff]
    %v654 = vld [vmem:[#allocation5 + $0x30] sm:$0xff]
    %v655 = vld [vmem:[#allocation5 + $0x38] sm:$0xff]
    %v656 = vld [vmem:[#allocation5 + $0x40] sm:$0xff]
    %v657 = vld [vmem:[#allocation5 + $0x48] sm:$0xff]
    %v658 = vld [vmem:[#allocation5 + $0x50] sm:$0xff]
    %v659 = vld [vmem:[#allocation5 + $0x58] sm:$0xff]
    %v660 = vld [vmem:[#allocation5 + $0x60] sm:$0xff]
    %v661 = vld [vmem:[#allocation5 + $0x68] sm:$0xff]
    %v662 = vld [vmem:[#allocation5 + $0x70] sm:$0xff]
    %v663 = vld [vmem:[#allocation5 + $0x78] sm:$0xff]
    %v664 = vld [vmem:[#allocation5 + $0x80] sm:$0xff]
    %v665 = vld [vmem:[#allocation5 + $0x88] sm:$0xff]
    %v666 = vld [vmem:[#allocation5 + $0x90] sm:$0xff]
    %v667 = vld [vmem:[#allocation5 + $0x98] sm:$0xff]
    %v668 = vld [vmem:[#allocation5 + $0xa0] sm:$0xff]
    %v669 = vld [vmem:[#allocation5 + $0xa8] sm:$0xff]
    %v670 = vld [vmem:[#allocation5 + $0xb0] sm:$0xff]
    %v671 = vld [vmem:[#allocation5 + $0xb8] sm:$0xff]
    %v672 = vld [vmem:[#allocation5 + $0xc0] sm:$0xff]
    %v673 = vld [vmem:[#allocation5 + $0xc8] sm:$0xff]
    %v674 = vld [vmem:[#allocation5 + $0xd0] sm:$0xff]
    %v675 = vld [vmem:[#allocation5 + $0xd8] sm:$0xff]
    %v676 = vld [vmem:[#allocation5 + $0xe0] sm:$0xff]
    %v677 = vld [vmem:[#allocation5 + $0xe8] sm:$0xff]
    %v678 = vld [vmem:[#allocation5 + $0xf0] sm:$0xff]
    %v679 = vld [vmem:[#allocation5 + $0xf8] sm:$0xff]
    %v712 = vunpack.c.l.b16 %v648
    %v713 = vunpack.c.h.b16 %v648
    %v714 = vunpack.c.l.b16 %v649
    %v715 = vunpack.c.h.b16 %v649
    %v716 = vunpack.c.l.b16 %v650
    %v717 = vunpack.c.h.b16 %v650
    %v718 = vunpack.c.l.b16 %v651
    %v719 = vunpack.c.h.b16 %v651
    %v720 = vunpack.c.l.b16 %v652
    %v721 = vunpack.c.h.b16 %v652
    %v722 = vunpack.c.l.b16 %v653
    %v723 = vunpack.c.h.b16 %v653
    %v724 = vunpack.c.l.b16 %v654
    %v725 = vunpack.c.h.b16 %v654
    %v726 = vunpack.c.l.b16 %v655
    %v727 = vunpack.c.h.b16 %v655
    %v728 = vunpack.c.l.b16 %v656
    %v729 = vunpack.c.h.b16 %v656
    %v730 = vunpack.c.l.b16 %v657
    %v731 = vunpack.c.h.b16 %v657
    %v732 = vunpack.c.l.b16 %v658
    %v733 = vunpack.c.h.b16 %v658
    %v734 = vunpack.c.l.b16 %v659
    %v735 = vunpack.c.h.b16 %v659
    %v736 = vunpack.c.l.b16 %v660
    %v737 = vunpack.c.h.b16 %v660
    %v738 = vunpack.c.l.b16 %v661
    %v739 = vunpack.c.h.b16 %v661
    %v740 = vunpack.c.l.b16 %v662
    %v741 = vunpack.c.h.b16 %v662
    %v742 = vunpack.c.l.b16 %v663
    %v743 = vunpack.c.h.b16 %v663
    %v744 = vunpack.c.l.b16 %v664
    %v745 = vunpack.c.h.b16 %v664
    %v746 = vunpack.c.l.b16 %v665
    %v747 = vunpack.c.h.b16 %v665
    %v748 = vunpack.c.l.b16 %v666
    %v749 = vunpack.c.h.b16 %v666
    %v750 = vunpack.c.l.b16 %v667
    %v751 = vunpack.c.h.b16 %v667
    %v752 = vunpack.c.l.b16 %v668
    %v753 = vunpack.c.h.b16 %v668
    %v754 = vunpack.c.l.b16 %v669
    %v755 = vunpack.c.h.b16 %v669
    %v756 = vunpack.c.l.b16 %v670
    %v757 = vunpack.c.h.b16 %v670
    %v758 = vunpack.c.l.b16 %v671
    %v759 = vunpack.c.h.b16 %v671
    %v760 = vunpack.c.l.b16 %v672
    %v761 = vunpack.c.h.b16 %v672
    %v762 = vunpack.c.l.b16 %v673
    %v763 = vunpack.c.h.b16 %v673
    %v764 = vunpack.c.l.b16 %v674
    %v765 = vunpack.c.h.b16 %v674
    %v766 = vunpack.c.l.b16 %v675
    %v767 = vunpack.c.h.b16 %v675
    %v768 = vunpack.c.l.b16 %v676
    %v769 = vunpack.c.h.b16 %v676
    %v770 = vunpack.c.l.b16 %v677
    %v771 = vunpack.c.h.b16 %v677
    %v772 = vunpack.c.l.b16 %v678
    %v773 = vunpack.c.h.b16 %v678
    %v774 = vunpack.c.l.b16 %v679
    %v775 = vunpack.c.h.b16 %v679
    %v776 = vpack.c.b16 %v714, %v712
    %v777 = vpack.c.b16 %v715, %v713
    %v778 = vpack.c.b16 %v718, %v716
    %v779 = vpack.c.b16 %v719, %v717
    %v780 = vpack.c.b16 %v722, %v720
    %v781 = vpack.c.b16 %v723, %v721
    %v782 = vpack.c.b16 %v726, %v724
    %v783 = vpack.c.b16 %v727, %v725
    %v784 = vpack.c.b16 %v730, %v728
    %v785 = vpack.c.b16 %v731, %v729
    %v786 = vpack.c.b16 %v734, %v732
    %v787 = vpack.c.b16 %v735, %v733
    %v788 = vpack.c.b16 %v738, %v736
    %v789 = vpack.c.b16 %v739, %v737
    %v790 = vpack.c.b16 %v742, %v740
    %v791 = vpack.c.b16 %v743, %v741
    %v792 = vpack.c.b16 %v746, %v744
    %v793 = vpack.c.b16 %v747, %v745
    %v794 = vpack.c.b16 %v750, %v748
    %v795 = vpack.c.b16 %v751, %v749
    %v796 = vpack.c.b16 %v754, %v752
    %v797 = vpack.c.b16 %v755, %v753
    %v798 = vpack.c.b16 %v758, %v756
    %v799 = vpack.c.b16 %v759, %v757
    %v800 = vpack.c.b16 %v762, %v760
    %v801 = vpack.c.b16 %v763, %v761
    %v802 = vpack.c.b16 %v766, %v764
    %v803 = vpack.c.b16 %v767, %v765
    %v804 = vpack.c.b16 %v770, %v768
    %v805 = vpack.c.b16 %v771, %v769
    %v806 = vpack.c.b16 %v774, %v772
    %v807 = vpack.c.b16 %v775, %v773
    %840 = vmatpush.bf16.msra.mxu0 %v790
    %841 = vmatpush.bf16.msra.mxu0 %v788
    %842 = vmatpush.bf16.msra.mxu0 %v786
    %843 = vmatpush.bf16.msra.mxu0 %v784
    %844 = vmatpush.bf16.msra.mxu0 %v782
    %845 = vmatpush.bf16.msra.mxu0 %v780
    %846 = vmatpush.bf16.msra.mxu0 %v778
    %847 = vmatpush.bf16.msra.mxu0 %v776
    %848 = vmatmul.bf16.gmra.mxu0 %v646
    %v849 = vpop.f32.mrf.mxu0
    %v850 = vadd.f32 0.0, %v849
    %v851 = vpop.f32.mrf.mxu0
    %v852 = vadd.f32 0.0, %v851
    %853 = vdwg.mxu0
    %854 = vmatpush.bf16.msra.mxu0 %v806
    %855 = vmatpush.bf16.msra.mxu0 %v804
    %856 = vmatpush.bf16.msra.mxu0 %v802
    %857 = vmatpush.bf16.msra.mxu0 %v800
    %858 = vmatpush.bf16.msra.mxu0 %v798
    %859 = vmatpush.bf16.msra.mxu0 %v796
    %860 = vmatpush.bf16.msra.mxu0 %v794
    %861 = vmatpush.bf16.msra.mxu0 %v792
    %862 = vmatmul.bf16.gmra.mxu0 %v647
    %v863 = vpop.f32.mrf.mxu0
    %v864 = vadd.f32 %v850, %v863
    %v865 = vpop.f32.mrf.mxu0
    %v866 = vadd.f32 %v852, %v865
    %867 = vdwg.mxu0
    %868 = vmatpush.bf16.msra.mxu0 %v791
    %869 = vmatpush.bf16.msra.mxu0 %v789
    %870 = vmatpush.bf16.msra.mxu0 %v787
    %871 = vmatpush.bf16.msra.mxu0 %v785
    %872 = vmatpush.bf16.msra.mxu0 %v783
    %873 = vmatpush.bf16.msra.mxu0 %v781
    %874 = vmatpush.bf16.msra.mxu0 %v779
    %875 = vmatpush.bf16.msra.mxu0 %v777
    %876 = vmatmul.bf16.gmra.mxu0 %v646
    %v877 = vpop.f32.mrf.mxu0
    %v878 = vadd.f32 0.0, %v877
    %v879 = vpop.f32.mrf.mxu0
    %v880 = vadd.f32 0.0, %v879
    %881 = vdwg.mxu0
    %882 = vmatpush.bf16.msra.mxu0 %v807
    %883 = vmatpush.bf16.msra.mxu0 %v805
    %884 = vmatpush.bf16.msra.mxu0 %v803
    %885 = vmatpush.bf16.msra.mxu0 %v801
    %886 = vmatpush.bf16.msra.mxu0 %v799
    %887 = vmatpush.bf16.msra.mxu0 %v797
    %888 = vmatpush.bf16.msra.mxu0 %v795
    %889 = vmatpush.bf16.msra.mxu0 %v793
    %890 = vmatmul.bf16.gmra.mxu0 %v647
    %v891 = vpop.f32.mrf.mxu0
    %v892 = vadd.f32 %v878, %v891
    %v893 = vpop.f32.mrf.mxu0
    %v894 = vadd.f32 %v880, %v893
    %895 = vdwg.mxu0
    %v896 = vadd.f32 %v642, %v864
    %v897 = vadd.f32 %v643, %v892
    %v898 = vadd.f32 %v644, %v866
    %v899 = vadd.f32 %v645, %v894
    %900 = vst [vmem:[#allocation2] sm:$0xff] %v896
    %901 = vst [vmem:[#allocation2 + $0x8] sm:$0xff] %v897
    %902 = vst [vmem:[#allocation2 + $0x10] sm:$0xff] %v898
    %903 = vst [vmem:[#allocation2 + $0x18] sm:$0xff] %v899
    // Predicated region
    $region26: #{_glu_call.1} parent=1 // pred_check
      %p904 = pneg %p46
    $region27: #{_glu_call.1} parent=1 // pred_check_branch
      %906 = sbr.rel (%p904) target = $region29
    $region28: #{_glu_call.1} parent=1 // pred_region
      %v907 = vld [vmem:[#allocation2] sm:$0xff]
      %v908 = vld [vmem:[#allocation2 + $0x8] sm:$0xff]
      %v909 = vld [vmem:[#allocation2 + $0x10] sm:$0xff]
      %v910 = vld [vmem:[#allocation2 + $0x18] sm:$0xff]
      %911 = vst [vmem:[%s3] sm:$0xff] %v907
      %912 = vst [vmem:[%s3 + $0x8] sm:$0xff] %v908
      %913 = vst [vmem:[%s3 + $0x10] sm:$0xff] %v909
      %914 = vst [vmem:[%s3 + $0x18] sm:$0xff] %v910
    $region29: #{_glu_call.1} parent=1 // pred_fallthru
      _
    // Predicated region
    $region30: #{_glu_call.1} parent=1 // pred_check
      _
    $region31: #{_glu_call.1} parent=1 // pred_check_branch
      %916 = sbr.rel (0) target = $region33
    $region32: #{_glu_call.1} parent=1 // pred_region
      _
    $region33: #{_glu_call.1} parent=1 // pred_fallthru
      _
    // Predicated region
    $region34: #{_glu_call.1} parent=1 // pred_check
      _
    $region35: #{_glu_call.1} parent=1 // pred_check_branch
      %918 = sbr.rel (0) target = $region37
    $region36: #{_glu_call.1} parent=1 // pred_region
      _
    $region37: #{_glu_call.1} parent=1 // pred_fallthru
      _
    %919 = vsyncpa [#allocation4], 1
    %920 = vsyncpa [#allocation6], 1

</llo_original>
